<compile_context>
chip_gen: v6e
topology: v6e:2x2x1
jax: 0.10.0
libtpu: 0.0.40
codegen_flags: <defaults>
</compile_context>

<pallas_src>
import jax
import jax.numpy as jnp
from jax.experimental import pallas as pl
from jax.experimental.pallas import tpu as pltpu

N_AA = 20                   # amino-acid vocabulary size
N_ATOM = 4                  # backbone atoms: N, CA, C, O
D_MODEL = 32                # hidden width
N_CHI = 4                   # predicted chi angles per residue
D_OUT = 128                 # head output padded to a full lane width
TAU = 16.0                  # distance-softmax temperature (Angstrom^2)
F_IN = N_AA + N_ATOM * 3    # 32: fused [one-hot | CA-centered backbone coords]
CA_PAD = 8                  # CA xyz zero-padded 3 -> 8 (clean K for the Gram matmul)


def _packer_kernel(x_ref, ca_ref, cat_ref, sqj_ref,
                   w_in_ref, b_h_ref, w1_ref, b1_ref, w2_ref, b2_ref,
                   out_ref):
    Bt, L, F = x_ref.shape

    # Per-residue hidden features: one fused (Bt*L, 32) @ (32, D) MXU matmul.
    x = x_ref[...].reshape(Bt * L, F)
    h = jnp.dot(x, w_in_ref[...], preferred_element_type=jnp.float32) + b_h_ref[...]

    # Pairwise squared CA distances, Gram form — every intermediate is a
    # lane-dense (L, L) tile; the contraction (K=8) runs on the MXU.  The column
    # norms (plus the padded-column mask bias) come precomputed from the wrapper.
    ca = ca_ref[...]                                              # (Bt, L, 8)
    sq_i = jnp.sum(ca * ca, axis=-1, keepdims=True)               # (Bt, L, 1)
    gram = jnp.einsum('blk,bkm->blm', ca, cat_ref[...],
                      preferred_element_type=jnp.float32)         # (Bt, L, L)
    d2 = jnp.maximum(sq_i + sqj_ref[...] - 2.0 * gram, 0.0)       # (Bt, L, L)

    # Unnormalized distance-kernel weights. d2[i, i] == 0, so the row max of
    # -d2/TAU is 0: no max-subtraction needed and the row sum is >= ~1.
    e = jnp.exp(d2 * (-1.0 / TAU))                                # EUP
    inv = pl.reciprocal(jnp.sum(e, axis=-1, keepdims=True) + 1e-9, approx=True)

    # Neighborhood mixing on bf16 MXU inputs (f32 accumulate); normalization is
    # deferred to the (Bt, L, D) result — O(L*D) instead of O(L^2) multiplies.
    m = jnp.einsum('blm,bmd->bld',
                   e.astype(jnp.bfloat16),
                   h.reshape(Bt, L, D_MODEL).astype(jnp.bfloat16),
                   preferred_element_type=jnp.float32) * inv      # (Bt, L, D)

    # 2-layer MLP head -> chi angles in (-pi, pi); output padded to 128 lanes so
    # the store is a single unmasked lane-dense slab.
    m2 = m.reshape(Bt * L, D_MODEL)
    z = jnp.dot(m2, w1_ref[...], preferred_element_type=jnp.float32) + b1_ref[...]
    z = jax.nn.gelu(z, approximate=True)
    chi = jnp.dot(z, w2_ref[...], preferred_element_type=jnp.float32) + b2_ref[...]
    out_ref[...] = jnp.tanh(chi) * jnp.pi                         # (Bt*L, 128)


def _vmem_capacity_bytes():
    """Chip VMEM capacity; 128 MiB fallback (v5e/v6e) if the query is unavailable."""
    try:
        return int(pltpu.get_tpu_info().vmem_capacity_bytes)
    except Exception:
        return 128 * 1024 * 1024


def _tile_vmem_bytes(bt, L):
    """Rough VMEM footprint of one grid step with Bt batch elements."""
    rows = bt * L
    f32, dbuf = 4, 2
    inputs = dbuf * f32 * (rows * F_IN + 2 * rows * CA_PAD + bt * L)
    outputs = dbuf * f32 * rows * D_OUT
    temps = (f32 * (3 * bt * L * L)                     # gram, d2, e
             + f32 * (3 * rows * D_MODEL)               # h, m, z
             + f32 * rows * D_OUT                       # chi
             + 2 * (bt * L * L + rows * D_MODEL))       # bf16 copies for mixing matmul
    weights = dbuf * f32 * (F_IN * D_MODEL + D_MODEL * D_MODEL
                            + D_MODEL * D_OUT + 2 * D_MODEL + D_OUT)
    return inputs + outputs + temps + weights


def _pick_bt(B, L, vmem_budget, max_rows=4096):
    """Largest divisor of B that fits the VMEM budget; keeps grid >= 2 when B >= 2
    so the batch-tile axis can shard across v7x's two TensorCores."""
    bt_cap = max(1, B // 2) if B >= 2 else 1
    best = 1
    for d in range(1, bt_cap + 1):
        if B % d != 0:
            continue
        if d * L > max_rows:
            continue
        if _tile_vmem_bytes(d, L) > vmem_budget:
            continue
        best = d
    return best


def rde_sidechain_packer(backbone_coords, sequence, params):
    """backbone_coords: (B, L, 4, 3) f32;  sequence: (B, L) int32 in [0, 20)."""
    B, L, A, _ = backbone_coords.shape

    # ---- wrapper-side layout plumbing (free; keeps the kernel lane-dense) ----
    ca = backbone_coords[:, :, 1, :]                                   # (B, L, 3)
    feat = (backbone_coords - ca[:, :, None, :]).reshape(B, L, A * 3)  # (B, L, 12)
    onehot = jax.nn.one_hot(sequence, N_AA, dtype=jnp.float32)         # (B, L, 20)
    x = jnp.concatenate([onehot, feat], axis=-1)                       # (B, L, 32)

    # Center CA per structure: distances are translation-invariant and this
    # avoids Gram-form cancellation for un-centered (|c| ~ 100 A) coordinates.
    ca = ca - jnp.mean(ca, axis=1, keepdims=True)

    # Pad L up to a multiple of 8 (sublane alignment); padded residues are
    # masked out of the distance softmax via a large column bias.
    L_pad = -(-L // 8) * 8
    if L_pad != L:
        x = jnp.pad(x, ((0, 0), (0, L_pad - L), (0, 0)))
        ca = jnp.pad(ca, ((0, 0), (0, L_pad - L), (0, 0)))

    ca_pad = jnp.pad(ca, ((0, 0), (0, 0), (0, CA_PAD - 3)))            # (B, L_pad, 8)
    ca_t = jnp.swapaxes(ca_pad, 1, 2)                                  # (B, 8, L_pad)

    sq_j = jnp.sum(ca_pad * ca_pad, axis=-1)                           # (B, L_pad)
    col_bias = jnp.where(jnp.arange(L_pad) < L, 0.0, 1e9).astype(jnp.float32)
    sq_jb = (sq_j + col_bias[None, :])[:, None, :]                     # (B, 1, L_pad)

    w_emb, w_coord, b_h, w1, b1, w2, b2 = params
    w_in = jnp.concatenate([w_emb, w_coord], axis=0)                   # (32, D)
    w2p = jnp.pad(w2, ((0, 0), (0, D_OUT - N_CHI)))                    # (D, 128)
    b2p = jnp.pad(b2, ((0, 0), (0, D_OUT - N_CHI)))                    # (1, 128)

    # ---- per-generation tile / VMEM budget -----------------------------------
    vmem_cap = _vmem_capacity_bytes()            # 128 MiB v5e/v6e, 64 MiB v7x
    vmem_budget = int(vmem_cap * 0.45)
    vmem_limit = int(min(vmem_cap * 3 // 4, 100 * 1024 * 1024))
    Bt = _pick_bt(B, L_pad, vmem_budget)
    grid = (B // Bt,)

    def tile(shape):
        return pl.BlockSpec((Bt,) + shape, lambda t: (t, 0, 0))

    def rep(shape):
        n = len(shape)
        return pl.BlockSpec(shape, lambda t, _n=n: (0,) * _n)

    out = pl.pallas_call(
        _packer_kernel,
        out_shape=jax.ShapeDtypeStruct((B * L_pad, D_OUT), jnp.float32),
        grid=grid,
        in_specs=[
            tile((L_pad, F_IN)),            # x = [onehot | feat]
            tile((L_pad, CA_PAD)),          # ca (centered, padded)
            tile((CA_PAD, L_pad)),          # ca transposed
            tile((1, L_pad)),               # sq_j + padded-column bias
            rep((F_IN, D_MODEL)),           # w_in = [w_emb; w_coord]
            rep((1, D_MODEL)),              # b_h
            rep((D_MODEL, D_MODEL)),        # w1
            rep((1, D_MODEL)),              # b1
            rep((D_MODEL, D_OUT)),          # w2 (padded to 128 cols)
            rep((1, D_OUT)),                # b2 (padded)
        ],
        out_specs=pl.BlockSpec((Bt * L_pad, D_OUT), lambda t: (t, 0)),
        compiler_params=pltpu.CompilerParams(
            dimension_semantics=("parallel",),
            vmem_limit_bytes=vmem_limit),
    )(x, ca_pad, ca_t, sq_jb, w_in, b_h, w1, b1, w2p, b2p)

    return out.reshape(B, L_pad, D_OUT)[:, :L, :N_CHI]


def _reference_forward(backbone_coords, sequence, params):
    """Pure-JAX oracle (exact softmax, no bf16 casts, no padding)."""
    w_emb, w_coord, b_h, w1, b1, w2, b2 = params
    B, L, A, _ = backbone_coords.shape
    ca = backbone_coords[:, :, 1, :]
    feat = (backbone_coords - ca[:, :, None, :]).reshape(B, L, A * 3)
    onehot = jax.nn.one_hot(sequence, N_AA, dtype=jnp.float32)
    h = onehot @ w_emb + feat @ w_coord + b_h
    d2 = jnp.sum((ca[:, :, None, :] - ca[:, None, :, :]) ** 2, axis=-1)
    w = jax.nn.softmax(-d2 / TAU, axis=-1)
    m = jnp.einsum('blm,bmd->bld', w, h)
    z = jax.nn.gelu(m @ w1 + b1, approximate=True)
    chi = z @ w2 + b2
    return jnp.tanh(chi) * jnp.pi


def init_params(key):
    ks = jax.random.split(key, 4)
    w_emb = jax.random.normal(ks[0], (N_AA, D_MODEL), jnp.float32) * 0.1
    w_coord = jax.random.normal(ks[1], (N_ATOM * 3, D_MODEL), jnp.float32) * 0.1
    b_h = jnp.zeros((1, D_MODEL), jnp.float32)
    w1 = jax.random.normal(ks[2], (D_MODEL, D_MODEL), jnp.float32) * 0.1
    b1 = jnp.zeros((1, D_MODEL), jnp.float32)
    w2 = jax.random.normal(ks[3], (D_MODEL, N_CHI), jnp.float32) * 0.1
    b2 = jnp.zeros((1, N_CHI), jnp.float32)
    return (w_emb, w_coord, b_h, w1, b1, w2, b2)


if __name__ == "__main__":
    key = jax.random.PRNGKey(0)
    kc, ks = jax.random.split(key, 2)
    B, L = 2, 8
    backbone_coords = jax.random.normal(kc, (B, L, N_ATOM, 3), jnp.float32) * 3.0
    sequence = jax.random.randint(ks, (B, L), 0, N_AA, dtype=jnp.int32)
    params = init_params(jax.random.PRNGKey(42))

    out = rde_sidechain_packer(backbone_coords, sequence, params)
    jax.block_until_ready(out)
    assert out.shape == (B, L, N_CHI) and out.dtype == jnp.float32
    assert bool(jnp.all(jnp.isfinite(out)))

    ref = _reference_forward(backbone_coords, sequence, params)
    assert bool(jnp.allclose(out, ref, atol=5e-2, rtol=5e-2)), (
        "kernel/reference mismatch: max |diff| = %s" % float(jnp.max(jnp.abs(out - ref))))
    print("KERNEL_OK")
</pallas_src>

<mosaic_0001>
module attributes {stable_mosaic.version = 11 : i64} {
  func.func @_packer_kernel(%arg0: i32, %arg1: memref<1x8x32xf32, #tpu.memory_space<vmem>>, %arg2: memref<1x8x8xf32, #tpu.memory_space<vmem>>, %arg3: memref<1x8x8xf32, #tpu.memory_space<vmem>>, %arg4: memref<1x1x8xf32, #tpu.memory_space<vmem>>, %arg5: memref<32x32xf32, #tpu.memory_space<vmem>>, %arg6: memref<1x32xf32, #tpu.memory_space<vmem>>, %arg7: memref<32x32xf32, #tpu.memory_space<vmem>>, %arg8: memref<1x32xf32, #tpu.memory_space<vmem>>, %arg9: memref<32x128xf32, #tpu.memory_space<vmem>>, %arg10: memref<1x128xf32, #tpu.memory_space<vmem>>, %arg11: memref<8x128xf32, #tpu.memory_space<vmem>>) attributes {dimension_semantics = [#tpu.dimension_semantics<parallel>], iteration_bounds = array<i64: 2>, scalar_prefetch = 0 : i64, scratch_operands = 0 : i64, tpu.core_type = #tpu.core_type<tc>, window_params = [{transform_indices = @transform_0, window_bounds = array<i64: 1, 8, 32>}, {transform_indices = @transform_1, window_bounds = array<i64: 1, 8, 8>}, {transform_indices = @transform_2, window_bounds = array<i64: 1, 8, 8>}, {transform_indices = @transform_3, window_bounds = array<i64: 1, 1, 8>}, {pipeline_mode = #tpu.pipeline_mode<synchronous>, transform_indices = @transform_4, window_bounds = array<i64: 32, 32>}, {pipeline_mode = #tpu.pipeline_mode<synchronous>, transform_indices = @transform_5, window_bounds = array<i64: 1, 32>}, {pipeline_mode = #tpu.pipeline_mode<synchronous>, transform_indices = @transform_6, window_bounds = array<i64: 32, 32>}, {pipeline_mode = #tpu.pipeline_mode<synchronous>, transform_indices = @transform_7, window_bounds = array<i64: 1, 32>}, {pipeline_mode = #tpu.pipeline_mode<synchronous>, transform_indices = @transform_8, window_bounds = array<i64: 32, 128>}, {pipeline_mode = #tpu.pipeline_mode<synchronous>, transform_indices = @transform_9, window_bounds = array<i64: 1, 128>}, {transform_indices = @transform_10, window_bounds = array<i64: 8, 128>}]} {
    %c0 = arith.constant 0 : index
    %c0_0 = arith.constant 0 : index
    %c0_1 = arith.constant 0 : index
    %0 = vector.load %arg1[%c0, %c0_0, %c0_1] : memref<1x8x32xf32, #tpu.memory_space<vmem>>, vector<1x8x32xf32>
    %1 = vector.shape_cast %0 : vector<1x8x32xf32> to vector<8x32xf32>
    %c0_2 = arith.constant 0 : index
    %c0_3 = arith.constant 0 : index
    %2 = vector.load %arg5[%c0_2, %c0_3] : memref<32x32xf32, #tpu.memory_space<vmem>>, vector<32x32xf32>
    %cst = arith.constant dense<0.000000e+00> : vector<8x32xf32>
    %3 = tpu.matmul %1, %2, %cst {dimension_numbers = #tpu.dot_dimension_numbers<[1], [0], [0], [1], [0, 0, 1, 1], [], []>} : vector<8x32xf32>, vector<32x32xf32>, vector<8x32xf32> -> vector<8x32xf32>
    %c0_4 = arith.constant 0 : index
    %c0_5 = arith.constant 0 : index
    %4 = vector.load %arg6[%c0_4, %c0_5] : memref<1x32xf32, #tpu.memory_space<vmem>>, vector<1x32xf32>
    %5 = vector.broadcast %4 : vector<1x32xf32> to vector<8x32xf32>
    %6 = arith.addf %3, %5 : vector<8x32xf32>
    %c0_6 = arith.constant 0 : index
    %c0_7 = arith.constant 0 : index
    %c0_8 = arith.constant 0 : index
    %7 = vector.load %arg2[%c0_6, %c0_7, %c0_8] : memref<1x8x8xf32, #tpu.memory_space<vmem>>, vector<1x8x8xf32>
    %8 = arith.mulf %7, %7 : vector<1x8x8xf32>
    %cst_9 = arith.constant dense<0.000000e+00> : vector<1x8xf32>
    %9 = vector.multi_reduction <add>, %8, %cst_9 [2] : vector<1x8x8xf32> to vector<1x8xf32>
    %10 = vector.shape_cast %9 : vector<1x8xf32> to vector<1x8x1xf32>
    %c0_10 = arith.constant 0 : index
    %c0_11 = arith.constant 0 : index
    %c0_12 = arith.constant 0 : index
    %11 = vector.load %arg3[%c0_10, %c0_11, %c0_12] : memref<1x8x8xf32, #tpu.memory_space<vmem>>, vector<1x8x8xf32>
    "tpu.trace_start"() <{level = 10 : i32, message = "blk,bkm->blm"}> : () -> ()
    %cst_13 = arith.constant dense<0.000000e+00> : vector<1x8x8xf32>
    %12 = tpu.matmul %7, %11, %cst_13 {dimension_numbers = #tpu.dot_dimension_numbers<[2], [1], [1], [2], [0, 0, 0, 1, 1, 2], [0], [0]>} : vector<1x8x8xf32>, vector<1x8x8xf32>, vector<1x8x8xf32> -> vector<1x8x8xf32>
    "tpu.trace_stop"() : () -> ()
    %c0_14 = arith.constant 0 : index
    %c0_15 = arith.constant 0 : index
    %c0_16 = arith.constant 0 : index
    %13 = vector.load %arg4[%c0_14, %c0_15, %c0_16] : memref<1x1x8xf32, #tpu.memory_space<vmem>>, vector<1x1x8xf32>
    %14 = vector.broadcast %10 : vector<1x8x1xf32> to vector<1x8x8xf32>
    %15 = vector.broadcast %13 : vector<1x1x8xf32> to vector<1x8x8xf32>
    %16 = arith.addf %14, %15 : vector<1x8x8xf32>
    %cst_17 = arith.constant 2.000000e+00 : f32
    %17 = vector.broadcast %cst_17 : f32 to vector<1x8x8xf32>
    %18 = arith.mulf %17, %12 : vector<1x8x8xf32>
    %19 = arith.subf %16, %18 : vector<1x8x8xf32>
    %cst_18 = arith.constant 0.000000e+00 : f32
    %20 = vector.broadcast %cst_18 : f32 to vector<1x8x8xf32>
    %21 = arith.maximumf %19, %20 : vector<1x8x8xf32>
    %cst_19 = arith.constant -6.250000e-02 : f32
    %22 = vector.broadcast %cst_19 : f32 to vector<1x8x8xf32>
    %23 = arith.mulf %21, %22 : vector<1x8x8xf32>
    %24 = math.exp %23 : vector<1x8x8xf32>
    %cst_20 = arith.constant dense<0.000000e+00> : vector<1x8xf32>
    %25 = vector.multi_reduction <add>, %24, %cst_20 [2] : vector<1x8x8xf32> to vector<1x8xf32>
    %26 = vector.shape_cast %25 : vector<1x8xf32> to vector<1x8x1xf32>
    %cst_21 = arith.constant 9.99999971E-10 : f32
    %27 = vector.broadcast %cst_21 : f32 to vector<1x8x1xf32>
    %28 = arith.addf %26, %27 : vector<1x8x1xf32>
    %29 = tpu.reciprocal %28 {approx = true} : vector<1x8x1xf32> -> vector<1x8x1xf32>
    %30 = arith.truncf %24 : vector<1x8x8xf32> to vector<1x8x8xbf16>
    %31 = vector.shape_cast %6 : vector<8x32xf32> to vector<1x8x32xf32>
    %32 = arith.truncf %31 : vector<1x8x32xf32> to vector<1x8x32xbf16>
    "tpu.trace_start"() <{level = 10 : i32, message = "blm,bmd->bld"}> : () -> ()
    %cst_22 = arith.constant dense<0.000000e+00> : vector<1x8x32xf32>
    %33 = tpu.matmul %30, %32, %cst_22 {dimension_numbers = #tpu.dot_dimension_numbers<[2], [1], [1], [2], [0, 0, 0, 1, 1, 2], [0], [0]>} : vector<1x8x8xbf16>, vector<1x8x32xbf16>, vector<1x8x32xf32> -> vector<1x8x32xf32>
    "tpu.trace_stop"() : () -> ()
    %34 = vector.broadcast %29 : vector<1x8x1xf32> to vector<1x8x32xf32>
    %35 = arith.mulf %33, %34 : vector<1x8x32xf32>
    %36 = vector.shape_cast %35 : vector<1x8x32xf32> to vector<8x32xf32>
    %c0_23 = arith.constant 0 : index
    %c0_24 = arith.constant 0 : index
    %37 = vector.load %arg7[%c0_23, %c0_24] : memref<32x32xf32, #tpu.memory_space<vmem>>, vector<32x32xf32>
    %cst_25 = arith.constant dense<0.000000e+00> : vector<8x32xf32>
    %38 = tpu.matmul %36, %37, %cst_25 {dimension_numbers = #tpu.dot_dimension_numbers<[1], [0], [0], [1], [0, 0, 1, 1], [], []>} : vector<8x32xf32>, vector<32x32xf32>, vector<8x32xf32> -> vector<8x32xf32>
    %c0_26 = arith.constant 0 : index
    %c0_27 = arith.constant 0 : index
    %39 = vector.load %arg8[%c0_26, %c0_27] : memref<1x32xf32, #tpu.memory_space<vmem>>, vector<1x32xf32>
    %40 = vector.broadcast %39 : vector<1x32xf32> to vector<8x32xf32>
    %41 = arith.addf %38, %40 : vector<8x32xf32>
    %42 = arith.mulf %41, %41 : vector<8x32xf32>
    %43 = arith.mulf %41, %42 : vector<8x32xf32>
    %cst_28 = arith.constant 4.471500e-02 : f32
    %44 = vector.broadcast %cst_28 : f32 to vector<8x32xf32>
    %45 = arith.mulf %44, %43 : vector<8x32xf32>
    %46 = arith.addf %41, %45 : vector<8x32xf32>
    %cst_29 = arith.constant 0.797884583 : f32
    %47 = vector.broadcast %cst_29 : f32 to vector<8x32xf32>
    %48 = arith.mulf %47, %46 : vector<8x32xf32>
    %49 = math.tanh %48 : vector<8x32xf32>
    %cst_30 = arith.constant 1.000000e+00 : f32
    %50 = vector.broadcast %cst_30 : f32 to vector<8x32xf32>
    %51 = arith.addf %50, %49 : vector<8x32xf32>
    %cst_31 = arith.constant 5.000000e-01 : f32
    %52 = vector.broadcast %cst_31 : f32 to vector<8x32xf32>
    %53 = arith.mulf %52, %51 : vector<8x32xf32>
    %54 = arith.mulf %41, %53 : vector<8x32xf32>
    %c0_32 = arith.constant 0 : index
    %c0_33 = arith.constant 0 : index
    %55 = vector.load %arg9[%c0_32, %c0_33] : memref<32x128xf32, #tpu.memory_space<vmem>>, vector<32x128xf32>
    %cst_34 = arith.constant dense<0.000000e+00> : vector<8x128xf32>
    %56 = tpu.matmul %54, %55, %cst_34 {dimension_numbers = #tpu.dot_dimension_numbers<[1], [0], [0], [1], [0, 0, 1, 1], [], []>} : vector<8x32xf32>, vector<32x128xf32>, vector<8x128xf32> -> vector<8x128xf32>
    %c0_35 = arith.constant 0 : index
    %c0_36 = arith.constant 0 : index
    %57 = vector.load %arg10[%c0_35, %c0_36] : memref<1x128xf32, #tpu.memory_space<vmem>>, vector<1x128xf32>
    %58 = vector.broadcast %57 : vector<1x128xf32> to vector<8x128xf32>
    %59 = arith.addf %56, %58 : vector<8x128xf32>
    %60 = math.tanh %59 : vector<8x128xf32>
    %cst_37 = arith.constant 3.14159274 : f32
    %61 = vector.broadcast %cst_37 : f32 to vector<8x128xf32>
    %62 = arith.mulf %60, %61 : vector<8x128xf32>
    %c0_38 = arith.constant 0 : index
    %c0_39 = arith.constant 0 : index
    %63 = vector.load %arg11[%c0_38, %c0_39] : memref<8x128xf32, #tpu.memory_space<vmem>>, vector<8x128xf32>
    tpu.vector_store %arg11[%c0_38, %c0_39], %62 {strides = array<i32>} : memref<8x128xf32, #tpu.memory_space<vmem>>, vector<8x128xf32>,
    return
  }
  func.func @transform_0(%arg0: i32) -> (i32, i32, i32) {
    %c0_i32 = arith.constant 0 : i32
    %c0_i32_0 = arith.constant 0 : i32
    %c0_i32_1 = arith.constant 0 : i32
    return %arg0, %c0_i32, %c0_i32_0 : i32, i32, i32
  }
  func.func @transform_1(%arg0: i32) -> (i32, i32, i32) {
    %c0_i32 = arith.constant 0 : i32
    %c0_i32_0 = arith.constant 0 : i32
    %c0_i32_1 = arith.constant 0 : i32
    return %arg0, %c0_i32, %c0_i32_0 : i32, i32, i32
  }
  func.func @transform_2(%arg0: i32) -> (i32, i32, i32) {
    %c0_i32 = arith.constant 0 : i32
    %c0_i32_0 = arith.constant 0 : i32
    %c0_i32_1 = arith.constant 0 : i32
    return %arg0, %c0_i32, %c0_i32_0 : i32, i32, i32
  }
  func.func @transform_3(%arg0: i32) -> (i32, i32, i32) {
    %c0_i32 = arith.constant 0 : i32
    %c0_i32_0 = arith.constant 0 : i32
    %c0_i32_1 = arith.constant 0 : i32
    return %arg0, %c0_i32, %c0_i32_0 : i32, i32, i32
  }
  func.func @transform_4(%arg0: i32) -> (i32, i32) {
    %c0_i32 = arith.constant 0 : i32
    %c0_i32_0 = arith.constant 0 : i32
    %c0_i32_1 = arith.constant 0 : i32
    return %c0_i32, %c0_i32_0 : i32, i32
  }
  func.func @transform_5(%arg0: i32) -> (i32, i32) {
    %c0_i32 = arith.constant 0 : i32
    %c0_i32_0 = arith.constant 0 : i32
    %c0_i32_1 = arith.constant 0 : i32
    return %c0_i32, %c0_i32_0 : i32, i32
  }
  func.func @transform_6(%arg0: i32) -> (i32, i32) {
    %c0_i32 = arith.constant 0 : i32
    %c0_i32_0 = arith.constant 0 : i32
    %c0_i32_1 = arith.constant 0 : i32
    return %c0_i32, %c0_i32_0 : i32, i32
  }
  func.func @transform_7(%arg0: i32) -> (i32, i32) {
    %c0_i32 = arith.constant 0 : i32
    %c0_i32_0 = arith.constant 0 : i32
    %c0_i32_1 = arith.constant 0 : i32
    return %c0_i32, %c0_i32_0 : i32, i32
  }
  func.func @transform_8(%arg0: i32) -> (i32, i32) {
    %c0_i32 = arith.constant 0 : i32
    %c0_i32_0 = arith.constant 0 : i32
    %c0_i32_1 = arith.constant 0 : i32
    return %c0_i32, %c0_i32_0 : i32, i32
  }
  func.func @transform_9(%arg0: i32) -> (i32, i32) {
    %c0_i32 = arith.constant 0 : i32
    %c0_i32_0 = arith.constant 0 : i32
    %c0_i32_1 = arith.constant 0 : i32
    return %c0_i32, %c0_i32_0 : i32, i32
  }
  func.func @transform_10(%arg0: i32) -> (i32, i32) {
    %c0_i32 = arith.constant 0 : i32
    %c0_i32_0 = arith.constant 0 : i32
    return %arg0, %c0_i32 : i32, i32
  }
}

</mosaic_0001>

<llo_original>
// kernel: tpu_custom_call.1
$region0: #{tpu_custom_call.1}
  #allocation0 [shape = 'u32[]', space=smem, size = 0x4, offset = 0x4, fixed_abs, tag = 'smem constant byte address 0x4 - core index']
  #allocation1 [shape = 'u32[144,128]{1,0:T(1,128)}', space=vmem, size = 0x12000, scoped, tag = 'internal scratch']
  %s0 = inlined_call_operand.hbm [shape: f32[2,8,32], index: 0, kind: input, shape index: {}]
  %s1 = inlined_call_operand.hbm [shape: f32[2,8,8], index: 1, kind: input, shape index: {}]
  %s2 = inlined_call_operand.hbm [shape: f32[2,8,8], index: 2, kind: input, shape index: {}]
  %s3 = inlined_call_operand.vmem [shape: f32[2,1,8], index: 3, kind: input, shape index: {}]
  %s4 = inlined_call_operand.hbm [shape: f32[32,32], index: 4, kind: input, shape index: {}]
  %s5 = inlined_call_operand.vmem [shape: f32[1,32], index: 5, kind: input, shape index: {}]
  %s6 = inlined_call_operand.hbm [shape: f32[32,32], index: 6, kind: input, shape index: {}]
  %s7 = inlined_call_operand.vmem [shape: f32[1,32], index: 7, kind: input, shape index: {}]
  %s8 = inlined_call_operand.hbm [shape: f32[32,128], index: 8, kind: input, shape index: {}]
  %s9 = inlined_call_operand.vmem [shape: f32[1,128], index: 9, kind: input, shape index: {}]
  %s10 = inlined_call_operand.hbm [shape: f32[16,128], index: 10, kind: output, shape index: {}]
  %s11 = sld [smem:[#allocation0]]
  $region97: #{tpu_custom_call.1} parent=0
    _
  %s13 = ssub.s32 1, %s11
  %s14 = scalar_select 0, %s13, %s11
  $region1: #{tpu_custom_call.1} parent=0
    #allocation2 [shape = 'u8[8192]{0}', space=vmem, size = 0x2000, scoped, tag = 'input window, operand 0']
    #allocation3 [shape = 's32[2]{0}', space=sflag, size = 0x8, scoped, tag = 'scoped memory for tpu_custom_call.1']
    #allocation4 [shape = 's32[2]{0}', space=sflag, size = 0x8, scoped, tag = 'scoped memory for tpu_custom_call.1']
    #allocation5 [shape = 'u8[8192]{0}', space=vmem, size = 0x2000, scoped, tag = 'input window, operand 1']
    #allocation6 [shape = 's32[2]{0}', space=sflag, size = 0x8, scoped, tag = 'scoped memory for tpu_custom_call.1']
    #allocation7 [shape = 'u8[8192]{0}', space=vmem, size = 0x2000, scoped, tag = 'input window, operand 2']
    #allocation8 [shape = 'u8[16384]{0}', space=vmem, size = 0x4000, scoped, tag = 'input window, operand 4, single buffered']
    #allocation9 [shape = 's32[1]{0}', space=sflag, size = 0x4, scoped, tag = 'scoped memory for tpu_custom_call.1']
    #allocation10 [shape = 'u8[16384]{0}', space=vmem, size = 0x4000, scoped, tag = 'input window, operand 6, single buffered']
    #allocation11 [shape = 'u8[16384]{0}', space=vmem, size = 0x4000, scoped, tag = 'input window, operand 8, single buffered']
    #allocation12 [shape = 's32[1]{0}', space=sflag, size = 0x4, scoped, tag = 'scoped memory for tpu_custom_call.1']
    #allocation13 [shape = 'u8[8192]{0}', space=vmem, size = 0x2000, scoped, tag = 'output window, operand 0']
    %15 = vsyncpa [#allocation3], 0
    %s16 = scalar_lea.sflag [#allocation3], 1
    %17 = vsyncpa %s16, 0
    %18 = vsyncpa [#allocation6], 0
    %s19 = scalar_lea.sflag [#allocation6], 1
    %20 = vsyncpa %s19, 0
    %21 = vsyncpa [#allocation9], 0
    %22 = vsyncpa [#allocation12], 0
    %23 = vsyncpa [#allocation4], 0
    %s24 = scalar_lea.sflag [#allocation4], 1
    %25 = vsyncpa %s24, 0
    loop: start=0, step=1, limit=4
    $region2: #{tpu_custom_call.1} parent=1 // loop_pre_header
      _
    $region3: #{tpu_custom_call.1} parent=1 // loop_header
      %s27 = sphi 0, %s31
      %p28 = scmp.ge.s32.totalorder %s27, 4
      %s37 = sphi 0, %s39
      %s40 = sphi 0, %s37
      %s41 = sphi 0, %s40
      %s57 = sphi 0, %s41
      %s63 = sphi 0, %s65
      %s66 = sphi 0, %s63
      %s67 = sphi 0, %s66
      %s83 = sphi 0, %s67
      %s89 = sphi 0, %s91
      %s92 = sphi 0, %s89
      %s93 = sphi 0, %s92
      %s109 = sphi 0, %s93
      %s115 = sphi 0, %s117
      %s118 = sphi 0, %s115
      %s119 = sphi 0, %s118
      %s135 = sphi 0, %s119
      %s139 = sphi 0, %s139
      %s141 = sphi 0, %s139
      %s142 = sphi 0, %s141
      %s156 = sphi 0, %s142
      %s160 = sphi 0, %s160
      %s162 = sphi 0, %s160
      %s163 = sphi 0, %s162
      %s177 = sphi 0, %s163
      %s181 = sphi 0, %s181
      %s183 = sphi 0, %s181
      %s184 = sphi 0, %s183
      %s198 = sphi 0, %s184
      %s202 = sphi 0, %s202
      %s204 = sphi 0, %s202
      %s205 = sphi 0, %s204
      %s219 = sphi 0, %s205
      %s223 = sphi 0, %s223
      %s225 = sphi 0, %s223
      %s226 = sphi 0, %s225
      %s240 = sphi 0, %s226
      %s244 = sphi 0, %s244
      %s246 = sphi 0, %s244
      %s247 = sphi 0, %s246
      %s261 = sphi 0, %s247
      %s267 = sphi 0, %s269
      %s270 = sphi 0, %s267
      %s271 = sphi 0, %s270
      %s287 = sphi 0, %s271
    $region4: #{tpu_custom_call.1} parent=1 // loop_header_branch
      %30 = sbr.rel (%p28) target = $region8
    $region5: #{tpu_custom_call.1} parent=1 // loop_body
      %s32 = ssub.s32 %s27, 1
      %s33 = ssub.s32 %s27, 2
      %s34 = sadd.s32 %s27, 1
      %s35 = ssub.s32 %s27, %s34
      %p36 = scmp.eq.s32.totalorder %s35, 0
      %s38 = sadd.s32 %s37, 1
      %s39 = scalar_select %p36, %s37, %s38
      %p42 = pneg %p36
      %p43 = scmp.eq.s32.totalorder %s27, 1
      %p44 = por %p42, %p43
      %p45 = scmp.ne.s32.totalorder %s37, %s40
      %p46 = scmp.eq.s32.totalorder %s27, 0
      %p47 = por %p45, %p46
      %p48 = scmp.ne.s32.totalorder %s37, %s40
      %p49 = scmp.eq.s32.totalorder %s32, 1
      %p50 = por %p48, %p49
      %p51 = scmp.ne.s32.totalorder %s40, %s41
      %p52 = scmp.eq.s32.totalorder %s32, 0
      %p53 = por %p51, %p52
      %p54 = scmp.ne.s32.totalorder %s40, %s41
      %p55 = scmp.eq.s32.totalorder %s33, 1
      %p56 = por %p54, %p55
      %p58 = scmp.ne.s32.totalorder %s41, %s57
      %p59 = scmp.eq.s32.totalorder %s33, 0
      %p60 = por %p58, %p59
      %s61 = ssub.s32 %s27, %s34
      %p62 = scmp.eq.s32.totalorder %s61, 0
      %s64 = sadd.s32 %s63, 1
      %s65 = scalar_select %p62, %s63, %s64
      %p68 = pneg %p62
      %p69 = scmp.eq.s32.totalorder %s27, 1
      %p70 = por %p68, %p69
      %p71 = scmp.ne.s32.totalorder %s63, %s66
      %p72 = scmp.eq.s32.totalorder %s27, 0
      %p73 = por %p71, %p72
      %p74 = scmp.ne.s32.totalorder %s63, %s66
      %p75 = scmp.eq.s32.totalorder %s32, 1
      %p76 = por %p74, %p75
      %p77 = scmp.ne.s32.totalorder %s66, %s67
      %p78 = scmp.eq.s32.totalorder %s32, 0
      %p79 = por %p77, %p78
      %p80 = scmp.ne.s32.totalorder %s66, %s67
      %p81 = scmp.eq.s32.totalorder %s33, 1
      %p82 = por %p80, %p81
      %p84 = scmp.ne.s32.totalorder %s67, %s83
      %p85 = scmp.eq.s32.totalorder %s33, 0
      %p86 = por %p84, %p85
      %s87 = ssub.s32 %s27, %s34
      %p88 = scmp.eq.s32.totalorder %s87, 0
      %s90 = sadd.s32 %s89, 1
      %s91 = scalar_select %p88, %s89, %s90
      %p94 = pneg %p88
      %p95 = scmp.eq.s32.totalorder %s27, 1
      %p96 = por %p94, %p95
      %p97 = scmp.ne.s32.totalorder %s89, %s92
      %p98 = scmp.eq.s32.totalorder %s27, 0
      %p99 = por %p97, %p98
      %p100 = scmp.ne.s32.totalorder %s89, %s92
      %p101 = scmp.eq.s32.totalorder %s32, 1
      %p102 = por %p100, %p101
      %p103 = scmp.ne.s32.totalorder %s92, %s93
      %p104 = scmp.eq.s32.totalorder %s32, 0
      %p105 = por %p103, %p104
      %p106 = scmp.ne.s32.totalorder %s92, %s93
      %p107 = scmp.eq.s32.totalorder %s33, 1
      %p108 = por %p106, %p107
      %p110 = scmp.ne.s32.totalorder %s93, %s109
      %p111 = scmp.eq.s32.totalorder %s33, 0
      %p112 = por %p110, %p111
      %s113 = ssub.s32 %s27, %s34
      %p114 = scmp.eq.s32.totalorder %s113, 0
      %s116 = sadd.s32 %s115, 1
      %s117 = scalar_select %p114, %s115, %s116
      %p120 = pneg %p114
      %p121 = scmp.eq.s32.totalorder %s27, 1
      %p122 = por %p120, %p121
      %p123 = scmp.ne.s32.totalorder %s115, %s118
      %p124 = scmp.eq.s32.totalorder %s27, 0
      %p125 = por %p123, %p124
      %p126 = scmp.ne.s32.totalorder %s115, %s118
      %p127 = scmp.eq.s32.totalorder %s32, 1
      %p128 = por %p126, %p127
      %p129 = scmp.ne.s32.totalorder %s118, %s119
      %p130 = scmp.eq.s32.totalorder %s32, 0
      %p131 = por %p129, %p130
      %p132 = scmp.ne.s32.totalorder %s118, %s119
      %p133 = scmp.eq.s32.totalorder %s33, 1
      %p134 = por %p132, %p133
      %p136 = scmp.ne.s32.totalorder %s119, %s135
      %p137 = scmp.eq.s32.totalorder %s33, 0
      %p138 = por %p136, %p137
      %s140 = sadd.s32 %s139, 1
      %p143 = scmp.eq.s32.totalorder %s27, 1
      %p144 = scmp.ne.s32.totalorder %s139, %s141
      %p145 = scmp.eq.s32.totalorder %s27, 0
      %p146 = por %p144, %p145
      %p147 = scmp.ne.s32.totalorder %s139, %s141
      %p148 = scmp.eq.s32.totalorder %s32, 1
      %p149 = por %p147, %p148
      %p150 = scmp.ne.s32.totalorder %s141, %s142
      %p151 = scmp.eq.s32.totalorder %s32, 0
      %p152 = por %p150, %p151
      %p153 = scmp.ne.s32.totalorder %s141, %s142
      %p154 = scmp.eq.s32.totalorder %s33, 1
      %p155 = por %p153, %p154
      %p157 = scmp.ne.s32.totalorder %s142, %s156
      %p158 = scmp.eq.s32.totalorder %s33, 0
      %p159 = por %p157, %p158
      %s161 = sadd.s32 %s160, 1
      %p164 = scmp.eq.s32.totalorder %s27, 1
      %p165 = scmp.ne.s32.totalorder %s160, %s162
      %p166 = scmp.eq.s32.totalorder %s27, 0
      %p167 = por %p165, %p166
      %p168 = scmp.ne.s32.totalorder %s160, %s162
      %p169 = scmp.eq.s32.totalorder %s32, 1
      %p170 = por %p168, %p169
      %p171 = scmp.ne.s32.totalorder %s162, %s163
      %p172 = scmp.eq.s32.totalorder %s32, 0
      %p173 = por %p171, %p172
      %p174 = scmp.ne.s32.totalorder %s162, %s163
      %p175 = scmp.eq.s32.totalorder %s33, 1
      %p176 = por %p174, %p175
      %p178 = scmp.ne.s32.totalorder %s163, %s177
      %p179 = scmp.eq.s32.totalorder %s33, 0
      %p180 = por %p178, %p179
      %s182 = sadd.s32 %s181, 1
      %p185 = scmp.eq.s32.totalorder %s27, 1
      %p186 = scmp.ne.s32.totalorder %s181, %s183
      %p187 = scmp.eq.s32.totalorder %s27, 0
      %p188 = por %p186, %p187
      %p189 = scmp.ne.s32.totalorder %s181, %s183
      %p190 = scmp.eq.s32.totalorder %s32, 1
      %p191 = por %p189, %p190
      %p192 = scmp.ne.s32.totalorder %s183, %s184
      %p193 = scmp.eq.s32.totalorder %s32, 0
      %p194 = por %p192, %p193
      %p195 = scmp.ne.s32.totalorder %s183, %s184
      %p196 = scmp.eq.s32.totalorder %s33, 1
      %p197 = por %p195, %p196
      %p199 = scmp.ne.s32.totalorder %s184, %s198
      %p200 = scmp.eq.s32.totalorder %s33, 0
      %p201 = por %p199, %p200
      %s203 = sadd.s32 %s202, 1
      %p206 = scmp.eq.s32.totalorder %s27, 1
      %p207 = scmp.ne.s32.totalorder %s202, %s204
      %p208 = scmp.eq.s32.totalorder %s27, 0
      %p209 = por %p207, %p208
      %p210 = scmp.ne.s32.totalorder %s202, %s204
      %p211 = scmp.eq.s32.totalorder %s32, 1
      %p212 = por %p210, %p211
      %p213 = scmp.ne.s32.totalorder %s204, %s205
      %p214 = scmp.eq.s32.totalorder %s32, 0
      %p215 = por %p213, %p214
      %p216 = scmp.ne.s32.totalorder %s204, %s205
      %p217 = scmp.eq.s32.totalorder %s33, 1
      %p218 = por %p216, %p217
      %p220 = scmp.ne.s32.totalorder %s205, %s219
      %p221 = scmp.eq.s32.totalorder %s33, 0
      %p222 = por %p220, %p221
      %s224 = sadd.s32 %s223, 1
      %p227 = scmp.eq.s32.totalorder %s27, 1
      %p228 = scmp.ne.s32.totalorder %s223, %s225
      %p229 = scmp.eq.s32.totalorder %s27, 0
      %p230 = por %p228, %p229
      %p231 = scmp.ne.s32.totalorder %s223, %s225
      %p232 = scmp.eq.s32.totalorder %s32, 1
      %p233 = por %p231, %p232
      %p234 = scmp.ne.s32.totalorder %s225, %s226
      %p235 = scmp.eq.s32.totalorder %s32, 0
      %p236 = por %p234, %p235
      %p237 = scmp.ne.s32.totalorder %s225, %s226
      %p238 = scmp.eq.s32.totalorder %s33, 1
      %p239 = por %p237, %p238
      %p241 = scmp.ne.s32.totalorder %s226, %s240
      %p242 = scmp.eq.s32.totalorder %s33, 0
      %p243 = por %p241, %p242
      %s245 = sadd.s32 %s244, 1
      %p248 = scmp.eq.s32.totalorder %s27, 1
      %p249 = scmp.ne.s32.totalorder %s244, %s246
      %p250 = scmp.eq.s32.totalorder %s27, 0
      %p251 = por %p249, %p250
      %p252 = scmp.ne.s32.totalorder %s244, %s246
      %p253 = scmp.eq.s32.totalorder %s32, 1
      %p254 = por %p252, %p253
      %p255 = scmp.ne.s32.totalorder %s246, %s247
      %p256 = scmp.eq.s32.totalorder %s32, 0
      %p257 = por %p255, %p256
      %p258 = scmp.ne.s32.totalorder %s246, %s247
      %p259 = scmp.eq.s32.totalorder %s33, 1
      %p260 = por %p258, %p259
      %p262 = scmp.ne.s32.totalorder %s247, %s261
      %p263 = scmp.eq.s32.totalorder %s33, 0
      %p264 = por %p262, %p263
      %s265 = ssub.s32 %s27, %s34
      %p266 = scmp.eq.s32.totalorder %s265, 0
      %s268 = sadd.s32 %s267, 1
      %s269 = scalar_select %p266, %s267, %s268
      %p272 = pneg %p266
      %p273 = scmp.eq.s32.totalorder %s27, 1
      %p274 = por %p272, %p273
      %p275 = scmp.ne.s32.totalorder %s267, %s270
      %p276 = scmp.eq.s32.totalorder %s27, 0
      %p277 = por %p275, %p276
      %p278 = scmp.ne.s32.totalorder %s267, %s270
      %p279 = scmp.eq.s32.totalorder %s32, 1
      %p280 = por %p278, %p279
      %p281 = scmp.ne.s32.totalorder %s270, %s271
      %p282 = scmp.eq.s32.totalorder %s32, 0
      %p283 = por %p281, %p282
      %p284 = scmp.ne.s32.totalorder %s270, %s271
      %p285 = scmp.eq.s32.totalorder %s33, 1
      %p286 = por %p284, %p285
      %p288 = scmp.ne.s32.totalorder %s271, %s287
      %p289 = scmp.eq.s32.totalorder %s33, 0
      %p290 = por %p288, %p289
      %p291 = scmp.le.s32.totalorder 1, %s27
      %p292 = scmp.lt.s32.totalorder %s27, 3
      %p293 = pnand %p291, %p292
      %p294 = pneg %p293
      // Predicated region
      $region9: #{tpu_custom_call.1} parent=5 // pred_check
        _
      $region10: #{tpu_custom_call.1} parent=5 // pred_check_branch
        %296 = sbr.rel (%p293) target = $region12
      $region11: #{tpu_custom_call.1} parent=5 // pred_region
        %s297 = ssub.s32 %s27, 1
        // Predicated region
        $region13: #{tpu_custom_call.1} parent=11 // pred_check
          %p298 = pneg %p152
        $region14: #{tpu_custom_call.1} parent=11 // pred_check_branch
          %300 = sbr.rel (%p298) target = $region16
        $region15: #{tpu_custom_call.1} parent=11 // pred_region
          %s302 = ssub.s32 512, 512
          %303 = vsyncadd [#allocation9], %s302
          %s304 = sshll.u32 [#allocation8], 4
          %s305 = int_to_ptr.vmem [resolvable:$true] %s304
          %310 = dma.hbm_to_vmem [thread:$0]  %s4, 512, %s305, [#allocation9], 128, 128, 8
        $region16: #{tpu_custom_call.1} parent=11 // pred_fallthru
          _
        // Predicated region
        $region17: #{tpu_custom_call.1} parent=11 // pred_check
          %p311 = pneg %p173
        $region18: #{tpu_custom_call.1} parent=11 // pred_check_branch
          %313 = sbr.rel (%p311) target = $region20
        $region19: #{tpu_custom_call.1} parent=11 // pred_region
          _
        $region20: #{tpu_custom_call.1} parent=11 // pred_fallthru
          _
        // Predicated region
        $region21: #{tpu_custom_call.1} parent=11 // pred_check
          %p314 = pneg %p194
        $region22: #{tpu_custom_call.1} parent=11 // pred_check_branch
          %316 = sbr.rel (%p314) target = $region24
        $region23: #{tpu_custom_call.1} parent=11 // pred_region
          %s318 = ssub.s32 512, 512
          %319 = vsyncadd [#allocation9], %s318
          %s320 = sshll.u32 [#allocation10], 4
          %s321 = int_to_ptr.vmem [resolvable:$true] %s320
          %326 = dma.hbm_to_vmem [thread:$0]  %s6, 512, %s321, [#allocation9], 128, 128, 8
        $region24: #{tpu_custom_call.1} parent=11 // pred_fallthru
          _
        // Predicated region
        $region25: #{tpu_custom_call.1} parent=11 // pred_check
          %p327 = pneg %p215
        $region26: #{tpu_custom_call.1} parent=11 // pred_check_branch
          %329 = sbr.rel (%p327) target = $region28
        $region27: #{tpu_custom_call.1} parent=11 // pred_region
          _
        $region28: #{tpu_custom_call.1} parent=11 // pred_fallthru
          _
        // Predicated region
        $region29: #{tpu_custom_call.1} parent=11 // pred_check
          %p330 = pneg %p236
        $region30: #{tpu_custom_call.1} parent=11 // pred_check_branch
          %332 = sbr.rel (%p330) target = $region32
        $region31: #{tpu_custom_call.1} parent=11 // pred_region
          %s334 = ssub.s32 512, 512
          %335 = vsyncadd [#allocation12], %s334
          %s336 = sshll.u32 [#allocation11], 4
          %s337 = int_to_ptr.vmem [resolvable:$true] %s336
          %342 = dma.hbm_to_vmem [thread:$0]  %s8, 512, %s337, [#allocation12], 128, 128, 8
        $region32: #{tpu_custom_call.1} parent=11 // pred_fallthru
          _
        // Predicated region
        $region33: #{tpu_custom_call.1} parent=11 // pred_check
          %p343 = pneg %p257
        $region34: #{tpu_custom_call.1} parent=11 // pred_check_branch
          %345 = sbr.rel (%p343) target = $region36
        $region35: #{tpu_custom_call.1} parent=11 // pred_region
          _
        $region36: #{tpu_custom_call.1} parent=11 // pred_fallthru
          _
      $region12: #{tpu_custom_call.1} parent=5 // pred_fallthru
        _
      %p346 = scmp.lt.s32.totalorder %s27, 2
      // Predicated region
      $region37: #{tpu_custom_call.1} parent=5 // pred_check
        %p347 = pneg %p346
      $region38: #{tpu_custom_call.1} parent=5 // pred_check_branch
        %349 = sbr.rel (%p347) target = $region40
      $region39: #{tpu_custom_call.1} parent=5 // pred_region
        // Predicated region
        $region41: #{tpu_custom_call.1} parent=39 // pred_check
          %p350 = pneg %p47
        $region42: #{tpu_custom_call.1} parent=39 // pred_check_branch
          %352 = sbr.rel (%p350) target = $region44
        $region43: #{tpu_custom_call.1} parent=39 // pred_region
          %s353 = sand.u32 %s37, 1
          %s354 = scalar_lea.sflag [#allocation3], %s353
          %s355 = sand.u32 %s37, 1
          %s356 = smul.addr %s355, 8
          %s357 = scalar_lea.vmem [#allocation2], %s356
          %s359 = ssub.s32 128, 128
          %360 = vsyncadd %s354, %s359
          %s361 = smul.addr %s27, 128
          %s362 = scalar_lea.hbm %s0, %s361
          %s364 = sshll.u32 %s357, 4
          %s365 = int_to_ptr.vmem [resolvable:$true] %s364
          %367 = dma.hbm_to_vmem [thread:$0]  %s362, 128, %s365, %s354
        $region44: #{tpu_custom_call.1} parent=39 // pred_fallthru
          _
        // Predicated region
        $region45: #{tpu_custom_call.1} parent=39 // pred_check
          %p368 = pneg %p73
        $region46: #{tpu_custom_call.1} parent=39 // pred_check_branch
          %370 = sbr.rel (%p368) target = $region48
        $region47: #{tpu_custom_call.1} parent=39 // pred_region
          %s371 = sand.u32 %s27, 1
          %s372 = scalar_lea.sflag [#allocation6], %s371
          %s373 = sand.u32 %s63, 1
          %s374 = smul.addr %s373, 8
          %s375 = scalar_lea.vmem [#allocation5], %s374
          %s377 = ssub.s32 128, 128
          %378 = vsyncadd %s372, %s377
          %s379 = smul.addr %s27, 128
          %s380 = scalar_lea.hbm %s1, %s379
          %s382 = sshll.u32 %s375, 4
          %s383 = int_to_ptr.vmem [resolvable:$true] %s382
          %385 = dma.hbm_to_vmem [thread:$0]  %s380, 128, %s383, %s372
        $region48: #{tpu_custom_call.1} parent=39 // pred_fallthru
          _
        // Predicated region
        $region49: #{tpu_custom_call.1} parent=39 // pred_check
          %p386 = pneg %p99
        $region50: #{tpu_custom_call.1} parent=39 // pred_check_branch
          %388 = sbr.rel (%p386) target = $region52
        $region51: #{tpu_custom_call.1} parent=39 // pred_region
          %s389 = sand.u32 %s27, 1
          %s390 = scalar_lea.sflag [#allocation6], %s389
          %s391 = sand.u32 %s89, 1
          %s392 = smul.addr %s391, 8
          %s393 = scalar_lea.vmem [#allocation7], %s392
          %s395 = ssub.s32 128, 128
          %396 = vsyncadd %s390, %s395
          %s397 = smul.addr %s27, 128
          %s398 = scalar_lea.hbm %s2, %s397
          %s400 = sshll.u32 %s393, 4
          %s401 = int_to_ptr.vmem [resolvable:$true] %s400
          %403 = dma.hbm_to_vmem [thread:$0]  %s398, 128, %s401, %s390
        $region52: #{tpu_custom_call.1} parent=39 // pred_fallthru
          _
        // Predicated region
        $region53: #{tpu_custom_call.1} parent=39 // pred_check
          %p404 = pneg %p125
        $region54: #{tpu_custom_call.1} parent=39 // pred_check_branch
          %406 = sbr.rel (%p404) target = $region56
        $region55: #{tpu_custom_call.1} parent=39 // pred_region
          %p407 = scmp.lt.s32.totalorder %s27, 1
          %s408 = scalar_select %p407, %s27, 1
          %s409 = scalar_lea.vmem %s3, %s408
        $region56: #{tpu_custom_call.1} parent=39 // pred_fallthru
          _
      $region40: #{tpu_custom_call.1} parent=5 // pred_fallthru
        _
      %p410 = scmp.le.s32.totalorder 1, %s27
      %p411 = scmp.lt.s32.totalorder %s27, 3
      %p412 = pnand %p410, %p411
      %p413 = pneg %p412
      // Predicated region
      $region57: #{tpu_custom_call.1} parent=5 // pred_check
        _
      $region58: #{tpu_custom_call.1} parent=5 // pred_check_branch
        %415 = sbr.rel (%p412) target = $region60
      $region59: #{tpu_custom_call.1} parent=5 // pred_region
        %s416 = ssub.s32 %s27, 1
        %s417 = sand.u32 %s40, 1
        %s418 = scalar_lea.sflag [#allocation3], %s417
        %s419 = sand.u32 %s40, 1
        %s420 = smul.addr %s419, 8
        %s421 = scalar_lea.vmem [#allocation2], %s420
        // Predicated region
        $region61: #{tpu_custom_call.1} parent=59 // pred_check
          %p422 = pneg %p53
        $region62: #{tpu_custom_call.1} parent=59 // pred_check_branch
          %424 = sbr.rel (%p422) target = $region64
        $region63: #{tpu_custom_call.1} parent=59 // pred_region
          %425 = dma.done %s418, 128
        $region64: #{tpu_custom_call.1} parent=59 // pred_fallthru
          _
        %s426 = sand.u32 %s32, 1
        %s427 = scalar_lea.sflag [#allocation6], %s426
        %s428 = sand.u32 %s66, 1
        %s429 = smul.addr %s428, 8
        %s430 = scalar_lea.vmem [#allocation5], %s429
        // Predicated region
        $region65: #{tpu_custom_call.1} parent=59 // pred_check
          %p431 = pneg %p79
        $region66: #{tpu_custom_call.1} parent=59 // pred_check_branch
          %433 = sbr.rel (%p431) target = $region68
        $region67: #{tpu_custom_call.1} parent=59 // pred_region
          %434 = dma.done %s427, 128
        $region68: #{tpu_custom_call.1} parent=59 // pred_fallthru
          _
        %s435 = sand.u32 %s32, 1
        %s436 = scalar_lea.sflag [#allocation6], %s435
        %s437 = sand.u32 %s92, 1
        %s438 = smul.addr %s437, 8
        %s439 = scalar_lea.vmem [#allocation7], %s438
        // Predicated region
        $region69: #{tpu_custom_call.1} parent=59 // pred_check
          %p440 = pneg %p105
        $region70: #{tpu_custom_call.1} parent=59 // pred_check_branch
          %442 = sbr.rel (%p440) target = $region72
        $region71: #{tpu_custom_call.1} parent=59 // pred_region
          %443 = dma.done %s436, 128
        $region72: #{tpu_custom_call.1} parent=59 // pred_fallthru
          _
        // Predicated region
        $region73: #{tpu_custom_call.1} parent=59 // pred_check
          %p444 = pneg %p152
        $region74: #{tpu_custom_call.1} parent=59 // pred_check_branch
          %446 = sbr.rel (%p444) target = $region76
        $region75: #{tpu_custom_call.1} parent=59 // pred_region
          %447 = dma.done [#allocation9], 512
        $region76: #{tpu_custom_call.1} parent=59 // pred_fallthru
          _
        // Predicated region
        $region77: #{tpu_custom_call.1} parent=59 // pred_check
          %p448 = pneg %p194
        $region78: #{tpu_custom_call.1} parent=59 // pred_check_branch
          %450 = sbr.rel (%p448) target = $region80
        $region79: #{tpu_custom_call.1} parent=59 // pred_region
          %451 = dma.done [#allocation9], 512
        $region80: #{tpu_custom_call.1} parent=59 // pred_fallthru
          _
        // Predicated region
        $region81: #{tpu_custom_call.1} parent=59 // pred_check
          %p452 = pneg %p236
        $region82: #{tpu_custom_call.1} parent=59 // pred_check_branch
          %454 = sbr.rel (%p452) target = $region84
        $region83: #{tpu_custom_call.1} parent=59 // pred_region
          %455 = dma.done [#allocation12], 512
        $region84: #{tpu_custom_call.1} parent=59 // pred_fallthru
          _
        %s456 = sand.u32 %s40, 1
        %s457 = scalar_lea.sflag [#allocation3], %s456
        %s458 = sand.u32 %s40, 1
        %s459 = smul.addr %s458, 8
        %s460 = scalar_lea.vmem [#allocation2], %s459
        %p461 = pneg %p53
        %p462 = pneg %p50
        %s463 = sand.u32 %s32, 1
        %s464 = scalar_lea.sflag [#allocation6], %s463
        %s465 = sand.u32 %s66, 1
        %s466 = smul.addr %s465, 8
        %s467 = scalar_lea.vmem [#allocation5], %s466
        %p468 = pneg %p79
        %p469 = pneg %p76
        %s470 = sand.u32 %s32, 1
        %s471 = scalar_lea.sflag [#allocation6], %s470
        %s472 = sand.u32 %s92, 1
        %s473 = smul.addr %s472, 8
        %s474 = scalar_lea.vmem [#allocation7], %s473
        %p475 = pneg %p105
        %p476 = pneg %p102
        %p477 = scmp.lt.s32.totalorder %s32, 1
        %s478 = scalar_select %p477, %s32, 1
        %s479 = scalar_lea.vmem %s3, %s478
        %p480 = pneg %p131
        %p481 = pneg %p128
        %p482 = pneg %p152
        %p483 = pneg %p149
        %p484 = pneg %p173
        %p485 = pneg %p170
        %p486 = pneg %p194
        %p487 = pneg %p191
        %p488 = pneg %p215
        %p489 = pneg %p212
        %p490 = pneg %p236
        %p491 = pneg %p233
        %p492 = pneg %p257
        %p493 = pneg %p254
        %p494 = pneg %p283
        %p495 = pneg %p280
        %s496 = sand.u32 %s270, 1
        %s497 = scalar_lea.sflag [#allocation4], %s496
        %s498 = sand.u32 %s270, 1
        %s499 = smul.addr %s498, 8
        %s500 = scalar_lea.vmem [#allocation13], %s499
        %p501 = scmp.lt.s32.totalorder %s32, 1
        %s502 = scalar_select %p501, %s32, 1
        %s503 = scalar_lea.vmem %s3, %s502
        %v505 = vld [vmem:[%s421] sm:$0xff]
        %v506 = vld [vmem:[#allocation8] sm:$0xff]
        %v507 = vld [vmem:[#allocation8 + $0x8] sm:$0xff]
        %v508 = vld [vmem:[#allocation8 + $0x10] sm:$0xff]
        %v509 = vld [vmem:[#allocation8 + $0x18] sm:$0xff]
        %v510 = vld [vmem:[%s5] sm:$0x1]
        %v512 = vlaneseq
        %v513 = vshrl.u32 %v512, 7
        %v514 = vsub.s32 0, %v513
        %v515 = vrot.slane %v510, %v514
        %vm517 = vcmask 261120
        %v519 = vsel %vm517, %v505, 0
        %521 = vmatprep.subr.mxu0 0.0
        %522 = vmatpush1.msra.mxu0 0.0
        %523 = vmatprep.subr.mxu0 0.0
        %524 = vmatpush1.msra.mxu0 0.0
        %525 = vmatprep.subr.mxu0 0.0
        %526 = vmatpush1.msra.mxu0 0.0
        %527 = vmatprep.subr.mxu0 0.0
        %528 = vmatpush1.msra.mxu0 0.0
        %529 = vmatprep.subr.mxu0 0.0
        %530 = vmatpush1.msra.mxu0 0.0
        %531 = vmatprep.subr.mxu0 0.0
        %532 = vmatpush1.msra.mxu0 0.0
        %533 = vmatprep.subr.mxu0 0.0
        %534 = vmatpush1.msra.mxu0 0.0
        %535 = vmatprep.subr.mxu0 0.0
        %536 = vmatpush1.msra.mxu0 0.0
        %537 = vmatprep.subr.mxu0 0.0
        %538 = vmatpush1.msra.mxu0 0.0
        %539 = vmatprep.subr.mxu0 0.0
        %540 = vmatpush1.msra.mxu0 0.0
        %541 = vmatprep.subr.mxu0 0.0
        %542 = vmatpush1.msra.mxu0 0.0
        %543 = vmatprep.subr.mxu0 0.0
        %544 = vmatpush1.msra.mxu0 0.0
        %545 = vmatprep.subr.mxu0 0.0
        %546 = vmatpush1.msra.mxu0 %v509
        %547 = vmatprep.subr.mxu0 0.0
        %548 = vmatpush1.msra.mxu0 %v508
        %549 = vmatprep.subr.mxu0 0.0
        %550 = vmatpush1.msra.mxu0 %v507
        %551 = vmatprep.subr.mxu0 0.0
        %552 = vmatpush1.msra.mxu0 %v506
        %553 = vmatprep.subr.mxu0 0.0
        %554 = vmatpush2.msra.mxu0 0.0
        %555 = vmatprep.subr.mxu0 0.0
        %556 = vmatpush2.msra.mxu0 0.0
        %557 = vmatprep.subr.mxu0 0.0
        %558 = vmatpush2.msra.mxu0 0.0
        %559 = vmatprep.subr.mxu0 0.0
        %560 = vmatpush2.msra.mxu0 0.0
        %561 = vmatprep.subr.mxu0 0.0
        %562 = vmatpush2.msra.mxu0 0.0
        %563 = vmatprep.subr.mxu0 0.0
        %564 = vmatpush2.msra.mxu0 0.0
        %565 = vmatprep.subr.mxu0 0.0
        %566 = vmatpush2.msra.mxu0 0.0
        %567 = vmatprep.subr.mxu0 0.0
        %568 = vmatpush2.msra.mxu0 0.0
        %569 = vmatprep.subr.mxu0 0.0
        %570 = vmatpush2.msra.mxu0 0.0
        %571 = vmatprep.subr.mxu0 0.0
        %572 = vmatpush2.msra.mxu0 0.0
        %573 = vmatprep.subr.mxu0 0.0
        %574 = vmatpush2.msra.mxu0 0.0
        %575 = vmatprep.subr.mxu0 0.0
        %576 = vmatpush2.msra.mxu0 0.0
        %577 = vmatprep.subr.mxu0 0.0
        %578 = vmatpush2.msra.mxu0 0.0
        %579 = vmatprep.subr.mxu0 0.0
        %580 = vmatpush2.msra.mxu0 0.0
        %581 = vmatprep.subr.mxu0 0.0
        %582 = vmatpush2.msra.mxu0 0.0
        %583 = vmatprep.subr.mxu0 0.0
        %584 = vmatpush2.msra.mxu0 0.0
        %585 = vmatprep.mubr.f32.mxu0 0.0
        %586 = vmatmul.mubr.f32.gmra.mxu0 %v519
        %v587 = vpop.f32.mrf.mxu0
        %v588 = vadd.f32 %v515, %v587
        %v589 = vpop.f32.mrf.mxu0
        %590 = vdwg.mxu0
        %v591 = vld [vmem:[%s430] sm:$0xff]
        %v592 = vmul.f32 %v591, %v591
        %vm593 = vcmask 64512
        %v594 = vsel %vm593, %v592, 0.0
        %595 = vadd.xlane.f32.xlu0 %v594
        %v596 = vpop.xlane.xlu0 %595
        %v597 = vld [vmem:[%s439] sm:$0xff]
        %v599 = vsel %vm593, %v591, 0
        %601 = vmatprep.subr.mxu0 0.0
        %602 = vmatpush1.msra.mxu0 0.0
        %603 = vmatprep.subr.mxu0 0.0
        %604 = vmatpush1.msra.mxu0 0.0
        %605 = vmatprep.subr.mxu0 0.0
        %606 = vmatpush1.msra.mxu0 0.0
        %607 = vmatprep.subr.mxu0 0.0
        %608 = vmatpush1.msra.mxu0 0.0
        %609 = vmatprep.subr.mxu0 0.0
        %610 = vmatpush1.msra.mxu0 0.0
        %611 = vmatprep.subr.mxu0 0.0
        %612 = vmatpush1.msra.mxu0 0.0
        %613 = vmatprep.subr.mxu0 0.0
        %614 = vmatpush1.msra.mxu0 0.0
        %615 = vmatprep.subr.mxu0 0.0
        %616 = vmatpush1.msra.mxu0 0.0
        %617 = vmatprep.subr.mxu0 0.0
        %618 = vmatpush1.msra.mxu0 0.0
        %619 = vmatprep.subr.mxu0 0.0
        %620 = vmatpush1.msra.mxu0 0.0
        %621 = vmatprep.subr.mxu0 0.0
        %622 = vmatpush1.msra.mxu0 0.0
        %623 = vmatprep.subr.mxu0 0.0
        %624 = vmatpush1.msra.mxu0 0.0
        %625 = vmatprep.subr.mxu0 0.0
        %626 = vmatpush1.msra.mxu0 0.0
        %627 = vmatprep.subr.mxu0 0.0
        %628 = vmatpush1.msra.mxu0 0.0
        %629 = vmatprep.subr.mxu0 0.0
        %630 = vmatpush1.msra.mxu0 0.0
        %631 = vmatprep.subr.mxu0 0.0
        %632 = vmatpush1.msra.mxu0 %v597
        %633 = vmatprep.subr.mxu0 0.0
        %634 = vmatpush2.msra.mxu0 0.0
        %635 = vmatprep.subr.mxu0 0.0
        %636 = vmatpush2.msra.mxu0 0.0
        %637 = vmatprep.subr.mxu0 0.0
        %638 = vmatpush2.msra.mxu0 0.0
        %639 = vmatprep.subr.mxu0 0.0
        %640 = vmatpush2.msra.mxu0 0.0
        %641 = vmatprep.subr.mxu0 0.0
        %642 = vmatpush2.msra.mxu0 0.0
        %643 = vmatprep.subr.mxu0 0.0
        %644 = vmatpush2.msra.mxu0 0.0
        %645 = vmatprep.subr.mxu0 0.0
        %646 = vmatpush2.msra.mxu0 0.0
        %647 = vmatprep.subr.mxu0 0.0
        %648 = vmatpush2.msra.mxu0 0.0
        %649 = vmatprep.subr.mxu0 0.0
        %650 = vmatpush2.msra.mxu0 0.0
        %651 = vmatprep.subr.mxu0 0.0
        %652 = vmatpush2.msra.mxu0 0.0
        %653 = vmatprep.subr.mxu0 0.0
        %654 = vmatpush2.msra.mxu0 0.0
        %655 = vmatprep.subr.mxu0 0.0
        %656 = vmatpush2.msra.mxu0 0.0
        %657 = vmatprep.subr.mxu0 0.0
        %658 = vmatpush2.msra.mxu0 0.0
        %659 = vmatprep.subr.mxu0 0.0
        %660 = vmatpush2.msra.mxu0 0.0
        %661 = vmatprep.subr.mxu0 0.0
        %662 = vmatpush2.msra.mxu0 0.0
        %663 = vmatprep.subr.mxu0 0.0
        %664 = vmatpush2.msra.mxu0 0.0
        %665 = vmatprep.mubr.f32.mxu0 0.0
        %666 = vmatmul.mubr.f32.gmra.mxu0 %v599
        %v667 = vpop.f32.mrf.mxu0
        %v668 = vadd.f32 0.0, %v667
        %v669 = vpop.f32.mrf.mxu0
        %670 = vdwg.mxu0
        %v671 = vld [vmem:[%s503] sm:$0x1]
        %v673 = vlaneseq
        %v674 = vshrl.u32 %v673, 7
        %v675 = vsub.s32 0, %v674
        %v676 = vrot.slane %v671, %v675
        %v678 = vadd.f32 %v596, %v676
        %v679 = vmul.f32 %v668, 2.0
        %v680 = vsub.f32 %v678, %v679
        %v681 = vmax.f32 %v680, 0.0
        %v682 = vmul.f32 %v681, -0.0625
        %v683 = vmul.f32 %v682, 1.442695
        %v684 = vpow.pop %v683
        %v685 = vsel %vm593, %v684, 0.0
        %686 = vadd.xlane.f32.xlu0 %v685
        %v687 = vpop.xlane.xlu0 %686
        %v688 = vadd.f32 %v687, 1e-09
        %v689 = vrcp.pop %v688
        %v690 = vpack.c.bf16 %v684, %v684
        %v691 = vpack.c.bf16 %v588, %v588
        %v693 = vsel %vm593, %v690, 0
        %vm695 = vcmask 1043456
        %v697 = vsel %vm695, %v691, 0
        %699 = vmatprep.subr.bf16.mxu0 0
        %700 = vmatpush1.bf16.msra.mxu0 0
        %701 = vmatprep.subr.bf16.mxu0 0
        %702 = vmatpush1.bf16.msra.mxu0 0
        %703 = vmatprep.subr.bf16.mxu0 0
        %704 = vmatpush1.bf16.msra.mxu0 0
        %705 = vmatprep.subr.bf16.mxu0 0
        %706 = vmatpush1.bf16.msra.mxu0 0
        %707 = vmatprep.subr.bf16.mxu0 0
        %708 = vmatpush1.bf16.msra.mxu0 0
        %709 = vmatprep.subr.bf16.mxu0 0
        %710 = vmatpush1.bf16.msra.mxu0 0
        %711 = vmatprep.subr.bf16.mxu0 0
        %712 = vmatpush1.bf16.msra.mxu0 0
        %713 = vmatprep.subr.bf16.mxu0 0
        %714 = vmatpush1.bf16.msra.mxu0 %v697
        %715 = vmatprep.subr.bf16.mxu0 0
        %716 = vmatpush2.bf16.msra.mxu0 0
        %717 = vmatprep.subr.bf16.mxu0 0
        %718 = vmatpush2.bf16.msra.mxu0 0
        %719 = vmatprep.subr.bf16.mxu0 0
        %720 = vmatpush2.bf16.msra.mxu0 0
        %721 = vmatprep.subr.bf16.mxu0 0
        %722 = vmatpush2.bf16.msra.mxu0 0
        %723 = vmatprep.subr.bf16.mxu0 0
        %724 = vmatpush2.bf16.msra.mxu0 0
        %725 = vmatprep.subr.bf16.mxu0 0
        %726 = vmatpush2.bf16.msra.mxu0 0
        %727 = vmatprep.subr.bf16.mxu0 0
        %728 = vmatpush2.bf16.msra.mxu0 0
        %729 = vmatprep.subr.bf16.mxu0 0
        %730 = vmatpush2.bf16.msra.mxu0 0
        %731 = vmatprep.mubr.bf16.mxu0 0
        %732 = vmatmul.mubr.bf16.gmra.mxu0 %v693
        %v733 = vpop.f32.mrf.mxu0
        %v734 = vadd.f32 0.0, %v733
        %v735 = vpop.f32.mrf.mxu0
        %v736 = vpop.f32.mrf.mxu0
        %v737 = vpop.f32.mrf.mxu0
        %738 = vdwg.mxu0
        %v739 = vmul.f32 %v734, %v689
        %v740 = vld [vmem:[#allocation10] sm:$0xff]
        %v741 = vld [vmem:[#allocation10 + $0x8] sm:$0xff]
        %v742 = vld [vmem:[#allocation10 + $0x10] sm:$0xff]
        %v743 = vld [vmem:[#allocation10 + $0x18] sm:$0xff]
        %v744 = vld [vmem:[%s7] sm:$0x1]
        %v746 = vlaneseq
        %v747 = vshrl.u32 %v746, 7
        %v748 = vsub.s32 0, %v747
        %v749 = vrot.slane %v744, %v748
        %v752 = vsel %vm517, %v739, 0
        %754 = vmatprep.subr.mxu0 0.0
        %755 = vmatpush1.msra.mxu0 0.0
        %756 = vmatprep.subr.mxu0 0.0
        %757 = vmatpush1.msra.mxu0 0.0
        %758 = vmatprep.subr.mxu0 0.0
        %759 = vmatpush1.msra.mxu0 0.0
        %760 = vmatprep.subr.mxu0 0.0
        %761 = vmatpush1.msra.mxu0 0.0
        %762 = vmatprep.subr.mxu0 0.0
        %763 = vmatpush1.msra.mxu0 0.0
        %764 = vmatprep.subr.mxu0 0.0
        %765 = vmatpush1.msra.mxu0 0.0
        %766 = vmatprep.subr.mxu0 0.0
        %767 = vmatpush1.msra.mxu0 0.0
        %768 = vmatprep.subr.mxu0 0.0
        %769 = vmatpush1.msra.mxu0 0.0
        %770 = vmatprep.subr.mxu0 0.0
        %771 = vmatpush1.msra.mxu0 0.0
        %772 = vmatprep.subr.mxu0 0.0
        %773 = vmatpush1.msra.mxu0 0.0
        %774 = vmatprep.subr.mxu0 0.0
        %775 = vmatpush1.msra.mxu0 0.0
        %776 = vmatprep.subr.mxu0 0.0
        %777 = vmatpush1.msra.mxu0 0.0
        %778 = vmatprep.subr.mxu0 0.0
        %779 = vmatpush1.msra.mxu0 %v743
        %780 = vmatprep.subr.mxu0 0.0
        %781 = vmatpush1.msra.mxu0 %v742
        %782 = vmatprep.subr.mxu0 0.0
        %783 = vmatpush1.msra.mxu0 %v741
        %784 = vmatprep.subr.mxu0 0.0
        %785 = vmatpush1.msra.mxu0 %v740
        %786 = vmatprep.subr.mxu0 0.0
        %787 = vmatpush2.msra.mxu0 0.0
        %788 = vmatprep.subr.mxu0 0.0
        %789 = vmatpush2.msra.mxu0 0.0
        %790 = vmatprep.subr.mxu0 0.0
        %791 = vmatpush2.msra.mxu0 0.0
        %792 = vmatprep.subr.mxu0 0.0
        %793 = vmatpush2.msra.mxu0 0.0
        %794 = vmatprep.subr.mxu0 0.0
        %795 = vmatpush2.msra.mxu0 0.0
        %796 = vmatprep.subr.mxu0 0.0
        %797 = vmatpush2.msra.mxu0 0.0
        %798 = vmatprep.subr.mxu0 0.0
        %799 = vmatpush2.msra.mxu0 0.0
        %800 = vmatprep.subr.mxu0 0.0
        %801 = vmatpush2.msra.mxu0 0.0
        %802 = vmatprep.subr.mxu0 0.0
        %803 = vmatpush2.msra.mxu0 0.0
        %804 = vmatprep.subr.mxu0 0.0
        %805 = vmatpush2.msra.mxu0 0.0
        %806 = vmatprep.subr.mxu0 0.0
        %807 = vmatpush2.msra.mxu0 0.0
        %808 = vmatprep.subr.mxu0 0.0
        %809 = vmatpush2.msra.mxu0 0.0
        %810 = vmatprep.subr.mxu0 0.0
        %811 = vmatpush2.msra.mxu0 0.0
        %812 = vmatprep.subr.mxu0 0.0
        %813 = vmatpush2.msra.mxu0 0.0
        %814 = vmatprep.subr.mxu0 0.0
        %815 = vmatpush2.msra.mxu0 0.0
        %816 = vmatprep.subr.mxu0 0.0
        %817 = vmatpush2.msra.mxu0 0.0
        %818 = vmatprep.mubr.f32.mxu0 0.0
        %819 = vmatmul.mubr.f32.gmra.mxu0 %v752
        %v820 = vpop.f32.mrf.mxu0
        %v821 = vadd.f32 %v749, %v820
        %v822 = vpop.f32.mrf.mxu0
        %823 = vdwg.mxu0
        %v824 = vmul.f32 %v821, %v821
        %v825 = vmul.f32 %v821, %v824
        %v826 = vmul.f32 %v825, 0.044715
        %v827 = vadd.f32 %v821, %v826
        %v828 = vmul.f32 %v827, 0.7978846
        %v829 = vtanh.pop %v828
        %v830 = vadd.f32 %v829, 1.0
        %v831 = vmul.f32 %v830, 0.5
        %v832 = vmul.f32 %v821, %v831
        %v833 = vld [vmem:[#allocation11] sm:$0xff]
        %v834 = vld [vmem:[#allocation11 + $0x8] sm:$0xff]
        %v835 = vld [vmem:[#allocation11 + $0x10] sm:$0xff]
        %v836 = vld [vmem:[#allocation11 + $0x18] sm:$0xff]
        %v837 = vld [vmem:[%s9] sm:$0x1]
        %v839 = vlaneseq
        %v840 = vshrl.u32 %v839, 7
        %v841 = vsub.s32 0, %v840
        %v842 = vrot.slane %v837, %v841
        %v845 = vsel %vm517, %v832, 0
        %847 = vmatprep.subr.mxu0 0.0
        %848 = vmatpush1.msra.mxu0 0.0
        %849 = vmatprep.subr.mxu0 0.0
        %850 = vmatpush1.msra.mxu0 0.0
        %851 = vmatprep.subr.mxu0 0.0
        %852 = vmatpush1.msra.mxu0 0.0
        %853 = vmatprep.subr.mxu0 0.0
        %854 = vmatpush1.msra.mxu0 0.0
        %855 = vmatprep.subr.mxu0 0.0
        %856 = vmatpush1.msra.mxu0 0.0
        %857 = vmatprep.subr.mxu0 0.0
        %858 = vmatpush1.msra.mxu0 0.0
        %859 = vmatprep.subr.mxu0 0.0
        %860 = vmatpush1.msra.mxu0 0.0
        %861 = vmatprep.subr.mxu0 0.0
        %862 = vmatpush1.msra.mxu0 0.0
        %863 = vmatprep.subr.mxu0 0.0
        %864 = vmatpush1.msra.mxu0 0.0
        %865 = vmatprep.subr.mxu0 0.0
        %866 = vmatpush1.msra.mxu0 0.0
        %867 = vmatprep.subr.mxu0 0.0
        %868 = vmatpush1.msra.mxu0 0.0
        %869 = vmatprep.subr.mxu0 0.0
        %870 = vmatpush1.msra.mxu0 0.0
        %871 = vmatprep.subr.mxu0 0.0
        %872 = vmatpush1.msra.mxu0 %v836
        %873 = vmatprep.subr.mxu0 0.0
        %874 = vmatpush1.msra.mxu0 %v835
        %875 = vmatprep.subr.mxu0 0.0
        %876 = vmatpush1.msra.mxu0 %v834
        %877 = vmatprep.subr.mxu0 0.0
        %878 = vmatpush1.msra.mxu0 %v833
        %879 = vmatprep.subr.mxu0 0.0
        %880 = vmatpush2.msra.mxu0 0.0
        %881 = vmatprep.subr.mxu0 0.0
        %882 = vmatpush2.msra.mxu0 0.0
        %883 = vmatprep.subr.mxu0 0.0
        %884 = vmatpush2.msra.mxu0 0.0
        %885 = vmatprep.subr.mxu0 0.0
        %886 = vmatpush2.msra.mxu0 0.0
        %887 = vmatprep.subr.mxu0 0.0
        %888 = vmatpush2.msra.mxu0 0.0
        %889 = vmatprep.subr.mxu0 0.0
        %890 = vmatpush2.msra.mxu0 0.0
        %891 = vmatprep.subr.mxu0 0.0
        %892 = vmatpush2.msra.mxu0 0.0
        %893 = vmatprep.subr.mxu0 0.0
        %894 = vmatpush2.msra.mxu0 0.0
        %895 = vmatprep.subr.mxu0 0.0
        %896 = vmatpush2.msra.mxu0 0.0
        %897 = vmatprep.subr.mxu0 0.0
        %898 = vmatpush2.msra.mxu0 0.0
        %899 = vmatprep.subr.mxu0 0.0
        %900 = vmatpush2.msra.mxu0 0.0
        %901 = vmatprep.subr.mxu0 0.0
        %902 = vmatpush2.msra.mxu0 0.0
        %903 = vmatprep.subr.mxu0 0.0
        %904 = vmatpush2.msra.mxu0 0.0
        %905 = vmatprep.subr.mxu0 0.0
        %906 = vmatpush2.msra.mxu0 0.0
        %907 = vmatprep.subr.mxu0 0.0
        %908 = vmatpush2.msra.mxu0 0.0
        %909 = vmatprep.subr.mxu0 0.0
        %910 = vmatpush2.msra.mxu0 0.0
        %911 = vmatprep.mubr.f32.mxu0 0.0
        %912 = vmatmul.mubr.f32.gmra.mxu0 %v845
        %v913 = vpop.f32.mrf.mxu0
        %v914 = vadd.f32 %v842, %v913
        %v915 = vpop.f32.mrf.mxu0
        %916 = vdwg.mxu0
        %v917 = vtanh.pop %v914
        %v918 = vmul.f32 %v917, 3.1415927
        %919 = vst [vmem:[%s500] sm:$0xff] %v918
        %s920 = sand.u32 %s270, 1
        %s921 = scalar_lea.sflag [#allocation4], %s920
        %s922 = sand.u32 %s270, 1
        %s923 = smul.addr %s922, 8
        %s924 = scalar_lea.vmem [#allocation13], %s923
        // Predicated region
        $region85: #{tpu_custom_call.1} parent=59 // pred_check
          %p925 = pneg %p280
        $region86: #{tpu_custom_call.1} parent=59 // pred_check_branch
          %927 = sbr.rel (%p925) target = $region88
        $region87: #{tpu_custom_call.1} parent=59 // pred_region
          %s929 = ssub.s32 128, 128
          %930 = vsyncadd %s921, %s929
          %s931 = smul.addr %s32, 128
          %s932 = scalar_lea.hbm %s10, %s931
          %s934 = sshll.u32 %s924, 4
          %s935 = int_to_ptr.vmem [resolvable:$true] %s934
          %937 = dma.vmem_to_hbm [thread:$0]  %s935, 128, %s932, %s921
        $region88: #{tpu_custom_call.1} parent=59 // pred_fallthru
          _
      $region60: #{tpu_custom_call.1} parent=5 // pred_fallthru
        _
      %p938 = scmp.le.s32.totalorder 2, %s27
      // Predicated region
      $region89: #{tpu_custom_call.1} parent=5 // pred_check
        %p939 = pneg %p938
      $region90: #{tpu_custom_call.1} parent=5 // pred_check_branch
        %941 = sbr.rel (%p939) target = $region92
      $region91: #{tpu_custom_call.1} parent=5 // pred_region
        %s942 = ssub.s32 %s27, 2
        // Predicated region
        $region93: #{tpu_custom_call.1} parent=91 // pred_check
          %p943 = pneg %p286
        $region94: #{tpu_custom_call.1} parent=91 // pred_check_branch
          %945 = sbr.rel (%p943) target = $region96
        $region95: #{tpu_custom_call.1} parent=91 // pred_region
          %s946 = sand.u32 %s271, 1
          %s947 = scalar_lea.sflag [#allocation4], %s946
          %s948 = sand.u32 %s271, 1
          %s949 = smul.addr %s948, 8
          %s950 = scalar_lea.vmem [#allocation13], %s949
          %951 = dma.done %s947, 128
        $region96: #{tpu_custom_call.1} parent=91 // pred_fallthru
          _
      $region92: #{tpu_custom_call.1} parent=5 // pred_fallthru
        _
    $region6: #{tpu_custom_call.1} parent=1 // loop_footer
      %s31 = sadd.s32 1, %s27
    $region7: #{tpu_custom_call.1} parent=1 // loop_footer_branch
      %26 = sbr.rel target = $region3
    $region8: #{tpu_custom_call.1} parent=1 // loop_exit
      _
    %952 = vsyncpa [#allocation3], 1
    %s953 = scalar_lea.sflag [#allocation3], 1
    %954 = vsyncpa %s953, 1
    %955 = vsyncpa [#allocation6], 1
    %s956 = scalar_lea.sflag [#allocation6], 1
    %957 = vsyncpa %s956, 1
    %958 = vsyncpa [#allocation9], 1
    %959 = vsyncpa [#allocation12], 1
    %960 = vsyncpa [#allocation4], 1
    %s961 = scalar_lea.sflag [#allocation4], 1
    %962 = vsyncpa %s961, 1

</llo_original>
